<compile_context>
chip_gen: v6e
topology: v6e:2x2x1
jax: 0.10.0
libtpu: 0.0.40
codegen_flags: <defaults>
</compile_context>

<pallas_src>
import jax
import jax.numpy as jnp
from jax.experimental import pallas as pl
from jax.experimental.pallas import tpu as pltpu


def _att_upsample_kernel(w22_ref, b22_ref, w33_ref, b33_ref,
                         x10_ref, x10t_ref, x15_ref, x15t_ref,
                         o15f_ref, o10f_ref):
    # w22_ref: (t15, t10) VMEM   b22_ref: (t15, 1) VMEM
    # w33_ref: (t15t,t10t) VMEM  b33_ref: (t15t,1) VMEM
    # x10_ref : (t10,  tM) VMEM  x10t_ref: (t10t, tM) VMEM
    # x15_ref : (t15,  tM) VMEM  x15t_ref: (t15t, tM) VMEM
    # o15f_ref: (t15+t15t, tM)   o10f_ref: (t10+t10t, tM)
    t15, t10 = w22_ref.shape
    t15t, t10t = w33_ref.shape
    f32 = jnp.float32

    # x_10_fus = concat_t(x_10, x_10_trj): raw pass-through, two full sub-block stores.
    o10f_ref[pl.ds(0, t10), :] = x10_ref[...].astype(o10f_ref.dtype)
    o10f_ref[pl.ds(t10, t10t), :] = x10t_ref[...].astype(o10f_ref.dtype)

    # Stream 1: temporal Linear(t10 -> t15) as one MXU dot (f32 accumulation),
    # bias add, elementwise gate, one full sub-block store.
    y10 = jnp.dot(w22_ref[...], x10_ref[...].astype(f32),
                  preferred_element_type=f32) + b22_ref[...]
    o15f_ref[pl.ds(0, t15), :] = (y10 * x15_ref[...].astype(f32)).astype(o15f_ref.dtype)

    # Stream 2: temporal Linear(t10t -> t15t), bias, gate, full sub-block store.
    y10t = jnp.dot(w33_ref[...], x10t_ref[...].astype(f32),
                   preferred_element_type=f32) + b33_ref[...]
    o15f_ref[pl.ds(t15, t15t), :] = (y10t * x15t_ref[...].astype(f32)).astype(o15f_ref.dtype)


def _pick_tile_m(M, max_tile=16384, min_tiles=1):
    """Largest multiple-of-128 divisor of M that is <= max_tile, preferring configurations
    with at least `min_tiles` grid steps along M (v7x megacore). Falls back to full M."""
    if M % 128 != 0:
        return M  # correct but lane-masked; pad n*C to 128 upstream if this matters.
    t = min(M, max_tile)
    t -= t % 128
    while t >= 128:
        if M % t == 0 and M // t >= min_tiles:
            return t
        t -= 128
    # Could not honor min_tiles; take the largest divisor <= max_tile instead.
    t = min(M, max_tile)
    t -= t % 128
    while t >= 128:
        if M % t == 0:
            return t
        t -= 128
    return M


def att_upsample(x_10, x_10_trj, x_15, x_15_trj,
                 thw_10, thw_10_trj, thw_15, thw_15_trj,
                 w22, b22, w33, b33):
    """Forward pass of att_upsample.

    x_10:     (B, t10 *n, C)   x_10_trj: (B, t10t*n, C)
    x_15:     (B, t15 *n, C)   x_15_trj: (B, t15t*n, C)
    w22/b22:  nn.Linear(t10, t15) params  (shape (t15, t10) / (t15,))
    w33/b33:  nn.Linear(t10t, t15t) params
    Returns (x_15, x_15_trj, x_15_fus, T_fus, x_10_fus, T_10_fus).
    NOTE: thw_* must be concrete (Python ints), not traced values.
    """
    B, L10, C = x_10.shape
    t10, t10t = int(thw_10[0]), int(thw_10_trj[0])
    t15, t15t = int(thw_15[0]), int(thw_15_trj[0])
    assert L10 % t10 == 0
    n = L10 // t10
    assert x_10_trj.shape == (B, t10t * n, C)
    assert x_15.shape == (B, t15 * n, C)
    assert x_15_trj.shape == (B, t15t * n, C)
    assert w22.shape == (t15, t10) and w33.shape == (t15t, t10t)

    M = n * C                                   # lane-dense flattened spatial*channel axis
    tM = _pick_tile_m(M, max_tile=16384, min_tiles=1 if B >= 2 else 2)
    grid = (B, M // tM)

    # Contiguous (free) views: (B, t, n*C); no transposes, no extra HBM pass.
    x10v = x_10.reshape(B, t10, M)
    x10tv = x_10_trj.reshape(B, t10t, M)
    x15v = x_15.reshape(B, t15, M)
    x15tv = x_15_trj.reshape(B, t15t, M)

    f32 = jnp.float32
    w22v = w22.astype(f32)
    b22v = b22.reshape(t15, 1).astype(f32)
    w33v = w33.astype(f32)
    b33v = b33.reshape(t15t, 1).astype(f32)

    dt15 = x_15.dtype
    dt10 = x_10.dtype
    const2 = lambda b, m: (0, 0)

    o15f, o10f = pl.pallas_call(
        _att_upsample_kernel,
        out_shape=(
            jax.ShapeDtypeStruct((B, t15 + t15t, M), dt15),
            jax.ShapeDtypeStruct((B, t10 + t10t, M), dt10),
        ),
        grid=grid,
        in_specs=[
            pl.BlockSpec((t15, t10), const2),
            pl.BlockSpec((t15, 1), const2),
            pl.BlockSpec((t15t, t10t), const2),
            pl.BlockSpec((t15t, 1), const2),
            pl.BlockSpec((None, t10, tM), lambda b, m: (b, 0, m)),
            pl.BlockSpec((None, t10t, tM), lambda b, m: (b, 0, m)),
            pl.BlockSpec((None, t15, tM), lambda b, m: (b, 0, m)),
            pl.BlockSpec((None, t15t, tM), lambda b, m: (b, 0, m)),
        ],
        out_specs=(
            pl.BlockSpec((None, t15 + t15t, tM), lambda b, m: (b, 0, m)),
            pl.BlockSpec((None, t10 + t10t, tM), lambda b, m: (b, 0, m)),
        ),
        compiler_params=pltpu.CompilerParams(
            dimension_semantics=("parallel", "parallel")),
    )(w22v, b22v, w33v, b33v, x10v, x10tv, x15v, x15tv)

    x_15_fus = o15f.reshape(B, (t15 + t15t) * n, C)
    x_10_fus = o10f.reshape(B, (t10 + t10t) * n, C)
    # x_15 / x_15_trj are byte-identical to the leading / trailing token slices of x_15_fus;
    # returning contiguous slices avoids duplicate HBM writes in the kernel (XLA folds the
    # slices into downstream consumers at ~zero cost).
    x_15_out = x_15_fus[:, : t15 * n, :]
    x_15_trj_out = x_15_fus[:, t15 * n:, :]
    T_fus = t15 + t15t
    T_10_fus = t10 + t10t
    return x_15_out, x_15_trj_out, x_15_fus, T_fus, x_10_fus, T_10_fus


if __name__ == "__main__":
    key = jax.random.PRNGKey(0)
    ks = jax.random.split(key, 8)

    # Small shapes consistent with the module defaults:
    #   Ln22 = Linear(6, 3)  => t10 = 6, t15 = 3
    #   Ln33 = Linear(3, 2)  => t10_trj = 3, t15_trj = 2
    B, C = 2, 32
    thw_10, thw_10_trj = [6, 4, 4], [3, 4, 4]
    thw_15, thw_15_trj = [3, 4, 4], [2, 4, 4]
    t10, t10t, t15, t15t = 6, 3, 3, 2
    n = thw_10[1] * thw_10[2]          # shared spatial grid, n = 16

    x_10 = jax.random.normal(ks[0], (B, t10 * n, C), dtype=jnp.float32)
    x_10_trj = jax.random.normal(ks[1], (B, t10t * n, C), dtype=jnp.float32)
    x_15 = jax.random.normal(ks[2], (B, t15 * n, C), dtype=jnp.float32)
    x_15_trj = jax.random.normal(ks[3], (B, t15t * n, C), dtype=jnp.float32)

    w22 = jax.random.normal(ks[4], (t15, t10), dtype=jnp.float32) * 0.1
    b22 = jax.random.normal(ks[5], (t15,), dtype=jnp.float32) * 0.1
    w33 = jax.random.normal(ks[6], (t15t, t10t), dtype=jnp.float32) * 0.1
    b33 = jax.random.normal(ks[7], (t15t,), dtype=jnp.float32) * 0.1

    outs = att_upsample(x_10, x_10_trj, x_15, x_15_trj,
                        thw_10, thw_10_trj, thw_15, thw_15_trj,
                        w22, b22, w33, b33)
    x_15_o, x_15_trj_o, x_15_fus, T_fus, x_10_fus, T_10_fus = outs
    jax.block_until_ready((x_15_o, x_15_trj_o, x_15_fus, x_10_fus))

    # Pure-JAX reference mirroring the PyTorch/einops algebra.
    def ref():
        x10r = x_10.reshape(B, t10, n, C).transpose(0, 3, 2, 1)        # b c n t
        x10tr = x_10_trj.reshape(B, t10t, n, C).transpose(0, 3, 2, 1)
        fus10 = jnp.concatenate([x10r, x10tr], axis=-1)                # b c n (t10+t10t)
        T10f = fus10.shape[-1]
        fus10 = fus10.transpose(0, 3, 2, 1).reshape(B, T10f * n, C)    # b (t n) c
        y10 = jnp.einsum('bcnt,jt->bcnj', x10r, w22) + b22
        y10t = jnp.einsum('bcnt,jt->bcnj', x10tr, w33) + b33
        y10 = y10.transpose(0, 3, 2, 1)                                 # b t n c
        y10t = y10t.transpose(0, 3, 2, 1)
        o15 = y10 * x_15.reshape(B, t15, n, C)
        o15t = y10t * x_15_trj.reshape(B, t15t, n, C)
        o15f = jnp.concatenate([o15, o15t], axis=1)
        Tf = o15f.shape[1]
        return (o15.reshape(B, t15 * n, C), o15t.reshape(B, t15t * n, C),
                o15f.reshape(B, (t15 + t15t) * n, C), Tf, fus10, T10f)

    r15, r15t, r15f, rTf, r10f, rT10f = ref()
    assert x_15_o.shape == r15.shape and x_15_trj_o.shape == r15t.shape
    assert T_fus == rTf and T_10_fus == rT10f
    assert jnp.allclose(x_15_o, r15, atol=1e-5, rtol=1e-5), "x_15 mismatch"
    assert jnp.allclose(x_15_trj_o, r15t, atol=1e-5, rtol=1e-5), "x_15_trj mismatch"
    assert jnp.allclose(x_15_fus, r15f, atol=1e-5, rtol=1e-5), "x_15_fus mismatch"
    assert jnp.allclose(x_10_fus, r10f, atol=1e-5, rtol=1e-5), "x_10_fus mismatch"

    print("KERNEL_OK")
</pallas_src>

<mosaic_0001>
module attributes {stable_mosaic.version = 11 : i64} {
  func.func @_att_upsample_kernel(%arg0: i32, %arg1: i32, %arg2: memref<3x6xf32, #tpu.memory_space<vmem>>, %arg3: memref<3x1xf32, #tpu.memory_space<vmem>>, %arg4: memref<2x3xf32, #tpu.memory_space<vmem>>, %arg5: memref<2x1xf32, #tpu.memory_space<vmem>>, %arg6: memref<1x6x512xf32, #tpu.memory_space<vmem>>, %arg7: memref<1x3x512xf32, #tpu.memory_space<vmem>>, %arg8: memref<1x3x512xf32, #tpu.memory_space<vmem>>, %arg9: memref<1x2x512xf32, #tpu.memory_space<vmem>>, %arg10: memref<1x5x512xf32, #tpu.memory_space<vmem>>, %arg11: memref<1x9x512xf32, #tpu.memory_space<vmem>>) attributes {dimension_semantics = [#tpu.dimension_semantics<parallel>, #tpu.dimension_semantics<parallel>], iteration_bounds = array<i64: 2, 1>, scalar_prefetch = 0 : i64, scratch_operands = 0 : i64, tpu.core_type = #tpu.core_type<tc>, window_params = [{pipeline_mode = #tpu.pipeline_mode<synchronous>, transform_indices = @transform_0, window_bounds = array<i64: 3, 6>}, {pipeline_mode = #tpu.pipeline_mode<synchronous>, transform_indices = @transform_1, window_bounds = array<i64: 3, 1>}, {pipeline_mode = #tpu.pipeline_mode<synchronous>, transform_indices = @transform_2, window_bounds = array<i64: 2, 3>}, {pipeline_mode = #tpu.pipeline_mode<synchronous>, transform_indices = @transform_3, window_bounds = array<i64: 2, 1>}, {transform_indices = @transform_4, window_bounds = array<i64: 1, 6, 512>}, {transform_indices = @transform_5, window_bounds = array<i64: 1, 3, 512>}, {transform_indices = @transform_6, window_bounds = array<i64: 1, 3, 512>}, {transform_indices = @transform_7, window_bounds = array<i64: 1, 2, 512>}, {transform_indices = @transform_8, window_bounds = array<i64: 1, 5, 512>}, {transform_indices = @transform_9, window_bounds = array<i64: 1, 9, 512>}]} {
    %c0 = arith.constant 0 : index
    %c0_0 = arith.constant 0 : index
    %c0_1 = arith.constant 0 : index
    %0 = vector.load %arg6[%c0, %c0_0, %c0_1] : memref<1x6x512xf32, #tpu.memory_space<vmem>>, vector<1x6x512xf32>
    %1 = vector.shape_cast %0 : vector<1x6x512xf32> to vector<6x512xf32>
    %c0_2 = arith.constant 0 : index
    %c0_3 = arith.constant 0 : index
    %c0_4 = arith.constant 0 : index
    %2 = vector.load %arg11[%c0_2, %c0_3, %c0_4] : memref<1x9x512xf32, #tpu.memory_space<vmem>>, vector<1x6x512xf32>
    %3 = vector.shape_cast %2 : vector<1x6x512xf32> to vector<6x512xf32>
    %4 = vector.shape_cast %1 : vector<6x512xf32> to vector<1x6x512xf32>
    tpu.vector_store %arg11[%c0_2, %c0_3, %c0_4], %4 {strides = array<i32>} : memref<1x9x512xf32, #tpu.memory_space<vmem>>, vector<1x6x512xf32>,
    %c0_5 = arith.constant 0 : index
    %c0_6 = arith.constant 0 : index
    %c0_7 = arith.constant 0 : index
    %5 = vector.load %arg7[%c0_5, %c0_6, %c0_7] : memref<1x3x512xf32, #tpu.memory_space<vmem>>, vector<1x3x512xf32>
    %6 = vector.shape_cast %5 : vector<1x3x512xf32> to vector<3x512xf32>
    %c0_8 = arith.constant 0 : index
    %c6 = arith.constant 6 : index
    %c0_9 = arith.constant 0 : index
    %7 = vector.load %arg11[%c0_8, %c6, %c0_9] : memref<1x9x512xf32, #tpu.memory_space<vmem>>, vector<1x3x512xf32>
    %8 = vector.shape_cast %7 : vector<1x3x512xf32> to vector<3x512xf32>
    %9 = vector.shape_cast %6 : vector<3x512xf32> to vector<1x3x512xf32>
    tpu.vector_store %arg11[%c0_8, %c6, %c0_9], %9 {strides = array<i32>} : memref<1x9x512xf32, #tpu.memory_space<vmem>>, vector<1x3x512xf32>,
    %c0_10 = arith.constant 0 : index
    %c0_11 = arith.constant 0 : index
    %10 = vector.load %arg2[%c0_10, %c0_11] : memref<3x6xf32, #tpu.memory_space<vmem>>, vector<3x6xf32>
    %c0_12 = arith.constant 0 : index
    %c0_13 = arith.constant 0 : index
    %c0_14 = arith.constant 0 : index
    %11 = vector.load %arg6[%c0_12, %c0_13, %c0_14] : memref<1x6x512xf32, #tpu.memory_space<vmem>>, vector<1x6x512xf32>
    %12 = vector.shape_cast %11 : vector<1x6x512xf32> to vector<6x512xf32>
    %cst = arith.constant dense<0.000000e+00> : vector<3x512xf32>
    %13 = tpu.matmul %10, %12, %cst {dimension_numbers = #tpu.dot_dimension_numbers<[1], [0], [0], [1], [0, 0, 1, 1], [], []>} : vector<3x6xf32>, vector<6x512xf32>, vector<3x512xf32> -> vector<3x512xf32>
    %c0_15 = arith.constant 0 : index
    %c0_16 = arith.constant 0 : index
    %14 = vector.load %arg3[%c0_15, %c0_16] : memref<3x1xf32, #tpu.memory_space<vmem>>, vector<3x1xf32>
    %15 = vector.broadcast %14 : vector<3x1xf32> to vector<3x512xf32>
    %16 = arith.addf %13, %15 : vector<3x512xf32>
    %c0_17 = arith.constant 0 : index
    %c0_18 = arith.constant 0 : index
    %c0_19 = arith.constant 0 : index
    %17 = vector.load %arg8[%c0_17, %c0_18, %c0_19] : memref<1x3x512xf32, #tpu.memory_space<vmem>>, vector<1x3x512xf32>
    %18 = vector.shape_cast %17 : vector<1x3x512xf32> to vector<3x512xf32>
    %19 = arith.mulf %16, %18 : vector<3x512xf32>
    %c0_20 = arith.constant 0 : index
    %c0_21 = arith.constant 0 : index
    %c0_22 = arith.constant 0 : index
    %20 = vector.load %arg10[%c0_20, %c0_21, %c0_22] : memref<1x5x512xf32, #tpu.memory_space<vmem>>, vector<1x3x512xf32>
    %21 = vector.shape_cast %20 : vector<1x3x512xf32> to vector<3x512xf32>
    %22 = vector.shape_cast %19 : vector<3x512xf32> to vector<1x3x512xf32>
    tpu.vector_store %arg10[%c0_20, %c0_21, %c0_22], %22 {strides = array<i32>} : memref<1x5x512xf32, #tpu.memory_space<vmem>>, vector<1x3x512xf32>,
    %c0_23 = arith.constant 0 : index
    %c0_24 = arith.constant 0 : index
    %23 = vector.load %arg4[%c0_23, %c0_24] : memref<2x3xf32, #tpu.memory_space<vmem>>, vector<2x3xf32>
    %c0_25 = arith.constant 0 : index
    %c0_26 = arith.constant 0 : index
    %c0_27 = arith.constant 0 : index
    %24 = vector.load %arg7[%c0_25, %c0_26, %c0_27] : memref<1x3x512xf32, #tpu.memory_space<vmem>>, vector<1x3x512xf32>
    %25 = vector.shape_cast %24 : vector<1x3x512xf32> to vector<3x512xf32>
    %cst_28 = arith.constant dense<0.000000e+00> : vector<2x512xf32>
    %26 = tpu.matmul %23, %25, %cst_28 {dimension_numbers = #tpu.dot_dimension_numbers<[1], [0], [0], [1], [0, 0, 1, 1], [], []>} : vector<2x3xf32>, vector<3x512xf32>, vector<2x512xf32> -> vector<2x512xf32>
    %c0_29 = arith.constant 0 : index
    %c0_30 = arith.constant 0 : index
    %27 = vector.load %arg5[%c0_29, %c0_30] : memref<2x1xf32, #tpu.memory_space<vmem>>, vector<2x1xf32>
    %28 = vector.broadcast %27 : vector<2x1xf32> to vector<2x512xf32>
    %29 = arith.addf %26, %28 : vector<2x512xf32>
    %c0_31 = arith.constant 0 : index
    %c0_32 = arith.constant 0 : index
    %c0_33 = arith.constant 0 : index
    %30 = vector.load %arg9[%c0_31, %c0_32, %c0_33] : memref<1x2x512xf32, #tpu.memory_space<vmem>>, vector<1x2x512xf32>
    %31 = vector.shape_cast %30 : vector<1x2x512xf32> to vector<2x512xf32>
    %32 = arith.mulf %29, %31 : vector<2x512xf32>
    %c0_34 = arith.constant 0 : index
    %c3 = arith.constant 3 : index
    %c0_35 = arith.constant 0 : index
    %33 = vector.load %arg10[%c0_34, %c3, %c0_35] : memref<1x5x512xf32, #tpu.memory_space<vmem>>, vector<1x2x512xf32>
    %34 = vector.shape_cast %33 : vector<1x2x512xf32> to vector<2x512xf32>
    %35 = vector.shape_cast %32 : vector<2x512xf32> to vector<1x2x512xf32>
    tpu.vector_store %arg10[%c0_34, %c3, %c0_35], %35 {strides = array<i32>} : memref<1x5x512xf32, #tpu.memory_space<vmem>>, vector<1x2x512xf32>,
    return
  }
  func.func @transform_0(%arg0: i32, %arg1: i32) -> (i32, i32) {
    %c0_i32 = arith.constant 0 : i32
    %c0_i32_0 = arith.constant 0 : i32
    %c0_i32_1 = arith.constant 0 : i32
    return %c0_i32, %c0_i32_0 : i32, i32
  }
  func.func @transform_1(%arg0: i32, %arg1: i32) -> (i32, i32) {
    %c0_i32 = arith.constant 0 : i32
    %c0_i32_0 = arith.constant 0 : i32
    %c0_i32_1 = arith.constant 0 : i32
    return %c0_i32, %c0_i32_0 : i32, i32
  }
  func.func @transform_2(%arg0: i32, %arg1: i32) -> (i32, i32) {
    %c0_i32 = arith.constant 0 : i32
    %c0_i32_0 = arith.constant 0 : i32
    %c0_i32_1 = arith.constant 0 : i32
    return %c0_i32, %c0_i32_0 : i32, i32
  }
  func.func @transform_3(%arg0: i32, %arg1: i32) -> (i32, i32) {
    %c0_i32 = arith.constant 0 : i32
    %c0_i32_0 = arith.constant 0 : i32
    %c0_i32_1 = arith.constant 0 : i32
    return %c0_i32, %c0_i32_0 : i32, i32
  }
  func.func @transform_4(%arg0: i32, %arg1: i32) -> (i32, i32, i32) {
    %c0_i32 = arith.constant 0 : i32
    %c0_i32_0 = arith.constant 0 : i32
    return %arg0, %c0_i32, %arg1 : i32, i32, i32
  }
  func.func @transform_5(%arg0: i32, %arg1: i32) -> (i32, i32, i32) {
    %c0_i32 = arith.constant 0 : i32
    %c0_i32_0 = arith.constant 0 : i32
    return %arg0, %c0_i32, %arg1 : i32, i32, i32
  }
  func.func @transform_6(%arg0: i32, %arg1: i32) -> (i32, i32, i32) {
    %c0_i32 = arith.constant 0 : i32
    %c0_i32_0 = arith.constant 0 : i32
    return %arg0, %c0_i32, %arg1 : i32, i32, i32
  }
  func.func @transform_7(%arg0: i32, %arg1: i32) -> (i32, i32, i32) {
    %c0_i32 = arith.constant 0 : i32
    %c0_i32_0 = arith.constant 0 : i32
    return %arg0, %c0_i32, %arg1 : i32, i32, i32
  }
  func.func @transform_8(%arg0: i32, %arg1: i32) -> (i32, i32, i32) {
    %c0_i32 = arith.constant 0 : i32
    %c0_i32_0 = arith.constant 0 : i32
    return %arg0, %c0_i32, %arg1 : i32, i32, i32
  }
  func.func @transform_9(%arg0: i32, %arg1: i32) -> (i32, i32, i32) {
    %c0_i32 = arith.constant 0 : i32
    %c0_i32_0 = arith.constant 0 : i32
    return %arg0, %c0_i32, %arg1 : i32, i32, i32
  }
}

</mosaic_0001>

<llo_original>
// kernel: tpu_custom_call.1
$region0: #{tpu_custom_call.1}
  #allocation0 [shape = 'u32[]', space=smem, size = 0x4, offset = 0x4, fixed_abs, tag = 'smem constant byte address 0x4 - core index']
  #allocation1 [shape = 'u32[144,128]{1,0:T(1,128)}', space=vmem, size = 0x12000, scoped, tag = 'internal scratch']
  %s0 = inlined_call_operand.vmem [shape: f32[3,6], index: 0, kind: input, shape index: {}]
  %s1 = inlined_call_operand.vmem [shape: f32[3,1], index: 1, kind: input, shape index: {}]
  %s2 = inlined_call_operand.vmem [shape: f32[2,3], index: 2, kind: input, shape index: {}]
  %s3 = inlined_call_operand.vmem [shape: f32[2,1], index: 3, kind: input, shape index: {}]
  %s4 = inlined_call_operand.vmem [shape: f32[2,6,512], index: 4, kind: input, shape index: {}]
  %s5 = inlined_call_operand.vmem [shape: f32[2,3,512], index: 5, kind: input, shape index: {}]
  %s6 = inlined_call_operand.vmem [shape: f32[2,3,512], index: 6, kind: input, shape index: {}]
  %s7 = inlined_call_operand.vmem [shape: f32[2,2,512], index: 7, kind: input, shape index: {}]
  %s8 = inlined_call_operand.vmem [shape: f32[2,5,512], index: 8, kind: output, shape index: {0}]
  %s9 = inlined_call_operand.vmem [shape: f32[2,9,512], index: 9, kind: output, shape index: {1}]
  %10 = xla_tuple %s8, %s9
  %s11 = sld [smem:[#allocation0]]
  $region73: #{tpu_custom_call.1} parent=0
    _
  %s13 = ssub.s32 1, %s11
  %s14 = scalar_select 0, %s13, %s11
  loop: start=0, step=1, limit=4
  $region2: #{tpu_custom_call.1} parent=0 // loop_pre_header
    _
  $region3: #{tpu_custom_call.1} parent=0 // loop_header
    %s16 = sphi 0, %s20
    %p17 = scmp.ge.s32.totalorder %s16, 4
    %s23 = sphi 0, %s35
    %s24 = sphi 0, %s31
    %s25 = sphi 0, %s23
    %s26 = sphi 0, %s24
    %s27 = sphi 0, %s25
    %s28 = sphi 0, %s26
    %s36 = sphi 0, %s36
    %s38 = sphi 0, %s36
    %s39 = sphi 0, %s38
    %s53 = sphi 0, %s39
    %s57 = sphi 0, %s57
    %s59 = sphi 0, %s57
    %s60 = sphi 0, %s59
    %s74 = sphi 0, %s60
    %s78 = sphi 0, %s78
    %s80 = sphi 0, %s78
    %s81 = sphi 0, %s80
    %s95 = sphi 0, %s81
    %s99 = sphi 0, %s99
    %s101 = sphi 0, %s99
    %s102 = sphi 0, %s101
    %s116 = sphi 0, %s102
    %s124 = sphi 0, %s126
    %s127 = sphi 0, %s124
    %s128 = sphi 0, %s127
    %s144 = sphi 0, %s128
    %s152 = sphi 0, %s154
    %s155 = sphi 0, %s152
    %s156 = sphi 0, %s155
    %s172 = sphi 0, %s156
    %s180 = sphi 0, %s182
    %s183 = sphi 0, %s180
    %s184 = sphi 0, %s183
    %s200 = sphi 0, %s184
    %s208 = sphi 0, %s210
    %s211 = sphi 0, %s208
    %s212 = sphi 0, %s211
    %s228 = sphi 0, %s212
    %s236 = sphi 0, %s238
    %s239 = sphi 0, %s236
    %s240 = sphi 0, %s239
    %s256 = sphi 0, %s240
    %s264 = sphi 0, %s266
    %s267 = sphi 0, %s264
    %s268 = sphi 0, %s267
    %s284 = sphi 0, %s268
  $region4: #{tpu_custom_call.1} parent=0 // loop_header_branch
    %19 = sbr.rel (%p17) target = $region8
  $region5: #{tpu_custom_call.1} parent=0 // loop_body
    %s21 = ssub.s32 %s16, 1
    %s22 = ssub.s32 %s16, 2
    %s29 = sadd.s32 1, %s24
    %p30 = scmp.ge.s32.totalorder %s29, 1
    %s31 = scalar_select %p30, 0, %s29
    %s32 = sadd.s32 1, %s23
    %s33 = scalar_select %p30, %s32, %s23
    %p34 = scmp.ge.s32.totalorder %s33, 2
    %s35 = scalar_select %p34, 0, %s33
    %s37 = sadd.s32 %s36, 1
    %p40 = scmp.eq.s32.totalorder %s16, 1
    %p41 = scmp.ne.s32.totalorder %s36, %s38
    %p42 = scmp.eq.s32.totalorder %s16, 0
    %p43 = por %p41, %p42
    %p44 = scmp.ne.s32.totalorder %s36, %s38
    %p45 = scmp.eq.s32.totalorder %s21, 1
    %p46 = por %p44, %p45
    %p47 = scmp.ne.s32.totalorder %s38, %s39
    %p48 = scmp.eq.s32.totalorder %s21, 0
    %p49 = por %p47, %p48
    %p50 = scmp.ne.s32.totalorder %s38, %s39
    %p51 = scmp.eq.s32.totalorder %s22, 1
    %p52 = por %p50, %p51
    %p54 = scmp.ne.s32.totalorder %s39, %s53
    %p55 = scmp.eq.s32.totalorder %s22, 0
    %p56 = por %p54, %p55
    %s58 = sadd.s32 %s57, 1
    %p61 = scmp.eq.s32.totalorder %s16, 1
    %p62 = scmp.ne.s32.totalorder %s57, %s59
    %p63 = scmp.eq.s32.totalorder %s16, 0
    %p64 = por %p62, %p63
    %p65 = scmp.ne.s32.totalorder %s57, %s59
    %p66 = scmp.eq.s32.totalorder %s21, 1
    %p67 = por %p65, %p66
    %p68 = scmp.ne.s32.totalorder %s59, %s60
    %p69 = scmp.eq.s32.totalorder %s21, 0
    %p70 = por %p68, %p69
    %p71 = scmp.ne.s32.totalorder %s59, %s60
    %p72 = scmp.eq.s32.totalorder %s22, 1
    %p73 = por %p71, %p72
    %p75 = scmp.ne.s32.totalorder %s60, %s74
    %p76 = scmp.eq.s32.totalorder %s22, 0
    %p77 = por %p75, %p76
    %s79 = sadd.s32 %s78, 1
    %p82 = scmp.eq.s32.totalorder %s16, 1
    %p83 = scmp.ne.s32.totalorder %s78, %s80
    %p84 = scmp.eq.s32.totalorder %s16, 0
    %p85 = por %p83, %p84
    %p86 = scmp.ne.s32.totalorder %s78, %s80
    %p87 = scmp.eq.s32.totalorder %s21, 1
    %p88 = por %p86, %p87
    %p89 = scmp.ne.s32.totalorder %s80, %s81
    %p90 = scmp.eq.s32.totalorder %s21, 0
    %p91 = por %p89, %p90
    %p92 = scmp.ne.s32.totalorder %s80, %s81
    %p93 = scmp.eq.s32.totalorder %s22, 1
    %p94 = por %p92, %p93
    %p96 = scmp.ne.s32.totalorder %s81, %s95
    %p97 = scmp.eq.s32.totalorder %s22, 0
    %p98 = por %p96, %p97
    %s100 = sadd.s32 %s99, 1
    %p103 = scmp.eq.s32.totalorder %s16, 1
    %p104 = scmp.ne.s32.totalorder %s99, %s101
    %p105 = scmp.eq.s32.totalorder %s16, 0
    %p106 = por %p104, %p105
    %p107 = scmp.ne.s32.totalorder %s99, %s101
    %p108 = scmp.eq.s32.totalorder %s21, 1
    %p109 = por %p107, %p108
    %p110 = scmp.ne.s32.totalorder %s101, %s102
    %p111 = scmp.eq.s32.totalorder %s21, 0
    %p112 = por %p110, %p111
    %p113 = scmp.ne.s32.totalorder %s101, %s102
    %p114 = scmp.eq.s32.totalorder %s22, 1
    %p115 = por %p113, %p114
    %p117 = scmp.ne.s32.totalorder %s102, %s116
    %p118 = scmp.eq.s32.totalorder %s22, 0
    %p119 = por %p117, %p118
    %s120 = ssub.s32 %s23, %s35
    %s121 = ssub.s32 %s24, %s31
    %s122 = sor.u32 %s120, %s121
    %p123 = scmp.eq.s32.totalorder %s122, 0
    %s125 = sadd.s32 %s124, 1
    %s126 = scalar_select %p123, %s124, %s125
    %p129 = pneg %p123
    %p130 = scmp.eq.s32.totalorder %s16, 1
    %p131 = por %p129, %p130
    %p132 = scmp.ne.s32.totalorder %s124, %s127
    %p133 = scmp.eq.s32.totalorder %s16, 0
    %p134 = por %p132, %p133
    %p135 = scmp.ne.s32.totalorder %s124, %s127
    %p136 = scmp.eq.s32.totalorder %s21, 1
    %p137 = por %p135, %p136
    %p138 = scmp.ne.s32.totalorder %s127, %s128
    %p139 = scmp.eq.s32.totalorder %s21, 0
    %p140 = por %p138, %p139
    %p141 = scmp.ne.s32.totalorder %s127, %s128
    %p142 = scmp.eq.s32.totalorder %s22, 1
    %p143 = por %p141, %p142
    %p145 = scmp.ne.s32.totalorder %s128, %s144
    %p146 = scmp.eq.s32.totalorder %s22, 0
    %p147 = por %p145, %p146
    %s148 = ssub.s32 %s23, %s35
    %s149 = ssub.s32 %s24, %s31
    %s150 = sor.u32 %s148, %s149
    %p151 = scmp.eq.s32.totalorder %s150, 0
    %s153 = sadd.s32 %s152, 1
    %s154 = scalar_select %p151, %s152, %s153
    %p157 = pneg %p151
    %p158 = scmp.eq.s32.totalorder %s16, 1
    %p159 = por %p157, %p158
    %p160 = scmp.ne.s32.totalorder %s152, %s155
    %p161 = scmp.eq.s32.totalorder %s16, 0
    %p162 = por %p160, %p161
    %p163 = scmp.ne.s32.totalorder %s152, %s155
    %p164 = scmp.eq.s32.totalorder %s21, 1
    %p165 = por %p163, %p164
    %p166 = scmp.ne.s32.totalorder %s155, %s156
    %p167 = scmp.eq.s32.totalorder %s21, 0
    %p168 = por %p166, %p167
    %p169 = scmp.ne.s32.totalorder %s155, %s156
    %p170 = scmp.eq.s32.totalorder %s22, 1
    %p171 = por %p169, %p170
    %p173 = scmp.ne.s32.totalorder %s156, %s172
    %p174 = scmp.eq.s32.totalorder %s22, 0
    %p175 = por %p173, %p174
    %s176 = ssub.s32 %s23, %s35
    %s177 = ssub.s32 %s24, %s31
    %s178 = sor.u32 %s176, %s177
    %p179 = scmp.eq.s32.totalorder %s178, 0
    %s181 = sadd.s32 %s180, 1
    %s182 = scalar_select %p179, %s180, %s181
    %p185 = pneg %p179
    %p186 = scmp.eq.s32.totalorder %s16, 1
    %p187 = por %p185, %p186
    %p188 = scmp.ne.s32.totalorder %s180, %s183
    %p189 = scmp.eq.s32.totalorder %s16, 0
    %p190 = por %p188, %p189
    %p191 = scmp.ne.s32.totalorder %s180, %s183
    %p192 = scmp.eq.s32.totalorder %s21, 1
    %p193 = por %p191, %p192
    %p194 = scmp.ne.s32.totalorder %s183, %s184
    %p195 = scmp.eq.s32.totalorder %s21, 0
    %p196 = por %p194, %p195
    %p197 = scmp.ne.s32.totalorder %s183, %s184
    %p198 = scmp.eq.s32.totalorder %s22, 1
    %p199 = por %p197, %p198
    %p201 = scmp.ne.s32.totalorder %s184, %s200
    %p202 = scmp.eq.s32.totalorder %s22, 0
    %p203 = por %p201, %p202
    %s204 = ssub.s32 %s23, %s35
    %s205 = ssub.s32 %s24, %s31
    %s206 = sor.u32 %s204, %s205
    %p207 = scmp.eq.s32.totalorder %s206, 0
    %s209 = sadd.s32 %s208, 1
    %s210 = scalar_select %p207, %s208, %s209
    %p213 = pneg %p207
    %p214 = scmp.eq.s32.totalorder %s16, 1
    %p215 = por %p213, %p214
    %p216 = scmp.ne.s32.totalorder %s208, %s211
    %p217 = scmp.eq.s32.totalorder %s16, 0
    %p218 = por %p216, %p217
    %p219 = scmp.ne.s32.totalorder %s208, %s211
    %p220 = scmp.eq.s32.totalorder %s21, 1
    %p221 = por %p219, %p220
    %p222 = scmp.ne.s32.totalorder %s211, %s212
    %p223 = scmp.eq.s32.totalorder %s21, 0
    %p224 = por %p222, %p223
    %p225 = scmp.ne.s32.totalorder %s211, %s212
    %p226 = scmp.eq.s32.totalorder %s22, 1
    %p227 = por %p225, %p226
    %p229 = scmp.ne.s32.totalorder %s212, %s228
    %p230 = scmp.eq.s32.totalorder %s22, 0
    %p231 = por %p229, %p230
    %s232 = ssub.s32 %s23, %s35
    %s233 = ssub.s32 %s24, %s31
    %s234 = sor.u32 %s232, %s233
    %p235 = scmp.eq.s32.totalorder %s234, 0
    %s237 = sadd.s32 %s236, 1
    %s238 = scalar_select %p235, %s236, %s237
    %p241 = pneg %p235
    %p242 = scmp.eq.s32.totalorder %s16, 1
    %p243 = por %p241, %p242
    %p244 = scmp.ne.s32.totalorder %s236, %s239
    %p245 = scmp.eq.s32.totalorder %s16, 0
    %p246 = por %p244, %p245
    %p247 = scmp.ne.s32.totalorder %s236, %s239
    %p248 = scmp.eq.s32.totalorder %s21, 1
    %p249 = por %p247, %p248
    %p250 = scmp.ne.s32.totalorder %s239, %s240
    %p251 = scmp.eq.s32.totalorder %s21, 0
    %p252 = por %p250, %p251
    %p253 = scmp.ne.s32.totalorder %s239, %s240
    %p254 = scmp.eq.s32.totalorder %s22, 1
    %p255 = por %p253, %p254
    %p257 = scmp.ne.s32.totalorder %s240, %s256
    %p258 = scmp.eq.s32.totalorder %s22, 0
    %p259 = por %p257, %p258
    %s260 = ssub.s32 %s23, %s35
    %s261 = ssub.s32 %s24, %s31
    %s262 = sor.u32 %s260, %s261
    %p263 = scmp.eq.s32.totalorder %s262, 0
    %s265 = sadd.s32 %s264, 1
    %s266 = scalar_select %p263, %s264, %s265
    %p269 = pneg %p263
    %p270 = scmp.eq.s32.totalorder %s16, 1
    %p271 = por %p269, %p270
    %p272 = scmp.ne.s32.totalorder %s264, %s267
    %p273 = scmp.eq.s32.totalorder %s16, 0
    %p274 = por %p272, %p273
    %p275 = scmp.ne.s32.totalorder %s264, %s267
    %p276 = scmp.eq.s32.totalorder %s21, 1
    %p277 = por %p275, %p276
    %p278 = scmp.ne.s32.totalorder %s267, %s268
    %p279 = scmp.eq.s32.totalorder %s21, 0
    %p280 = por %p278, %p279
    %p281 = scmp.ne.s32.totalorder %s267, %s268
    %p282 = scmp.eq.s32.totalorder %s22, 1
    %p283 = por %p281, %p282
    %p285 = scmp.ne.s32.totalorder %s268, %s284
    %p286 = scmp.eq.s32.totalorder %s22, 0
    %p287 = por %p285, %p286
    %p288 = scmp.le.s32.totalorder 1, %s16
    %p289 = scmp.lt.s32.totalorder %s16, 3
    %p290 = pnand %p288, %p289
    %p291 = pneg %p290
    // Predicated region
    $region9: #{tpu_custom_call.1} parent=5 // pred_check
      _
    $region10: #{tpu_custom_call.1} parent=5 // pred_check_branch
      %293 = sbr.rel (%p290) target = $region12
    $region11: #{tpu_custom_call.1} parent=5 // pred_region
      %s294 = ssub.s32 %s16, 1
      // Predicated region
      $region13: #{tpu_custom_call.1} parent=11 // pred_check
        %p295 = pneg %p49
      $region14: #{tpu_custom_call.1} parent=11 // pred_check_branch
        %297 = sbr.rel (%p295) target = $region16
      $region15: #{tpu_custom_call.1} parent=11 // pred_region
        _
      $region16: #{tpu_custom_call.1} parent=11 // pred_fallthru
        _
      // Predicated region
      $region17: #{tpu_custom_call.1} parent=11 // pred_check
        %p298 = pneg %p70
      $region18: #{tpu_custom_call.1} parent=11 // pred_check_branch
        %300 = sbr.rel (%p298) target = $region20
      $region19: #{tpu_custom_call.1} parent=11 // pred_region
        _
      $region20: #{tpu_custom_call.1} parent=11 // pred_fallthru
        _
      // Predicated region
      $region21: #{tpu_custom_call.1} parent=11 // pred_check
        %p301 = pneg %p91
      $region22: #{tpu_custom_call.1} parent=11 // pred_check_branch
        %303 = sbr.rel (%p301) target = $region24
      $region23: #{tpu_custom_call.1} parent=11 // pred_region
        _
      $region24: #{tpu_custom_call.1} parent=11 // pred_fallthru
        _
      // Predicated region
      $region25: #{tpu_custom_call.1} parent=11 // pred_check
        %p304 = pneg %p112
      $region26: #{tpu_custom_call.1} parent=11 // pred_check_branch
        %306 = sbr.rel (%p304) target = $region28
      $region27: #{tpu_custom_call.1} parent=11 // pred_region
        _
      $region28: #{tpu_custom_call.1} parent=11 // pred_fallthru
        _
    $region12: #{tpu_custom_call.1} parent=5 // pred_fallthru
      _
    %p307 = scmp.lt.s32.totalorder %s16, 2
    // Predicated region
    $region29: #{tpu_custom_call.1} parent=5 // pred_check
      %p308 = pneg %p307
    $region30: #{tpu_custom_call.1} parent=5 // pred_check_branch
      %310 = sbr.rel (%p308) target = $region32
    $region31: #{tpu_custom_call.1} parent=5 // pred_region
      // Predicated region
      $region33: #{tpu_custom_call.1} parent=31 // pred_check
        %p311 = pneg %p134
      $region34: #{tpu_custom_call.1} parent=31 // pred_check_branch
        %313 = sbr.rel (%p311) target = $region36
      $region35: #{tpu_custom_call.1} parent=31 // pred_region
        %s314 = smul.u32 4, %s24
        %p315 = scmp.lt.s32.totalorder %s23, 1
        %s316 = scalar_select %p315, %s23, 1
        %p317 = scmp.lt.s32.totalorder %s314, 3
        %s318 = scalar_select %p317, %s314, 3
        %s319 = smul.addr %s316, 4
        %s320 = sadd.s32 %s318, %s319
        %s321 = smul.addr %s320, 8
        %s322 = scalar_lea.vmem %s4, %s321
        %s323 = smul.u32 4, %s24
      $region36: #{tpu_custom_call.1} parent=31 // pred_fallthru
        _
      // Predicated region
      $region37: #{tpu_custom_call.1} parent=31 // pred_check
        %p324 = pneg %p162
      $region38: #{tpu_custom_call.1} parent=31 // pred_check_branch
        %326 = sbr.rel (%p324) target = $region40
      $region39: #{tpu_custom_call.1} parent=31 // pred_region
        %s327 = smul.u32 4, %s24
        %p328 = scmp.lt.s32.totalorder %s23, 1
        %s329 = scalar_select %p328, %s23, 1
        %p330 = scmp.lt.s32.totalorder %s327, 3
        %s331 = scalar_select %p330, %s327, 3
        %s332 = smul.addr %s329, 4
        %s333 = sadd.s32 %s331, %s332
        %s334 = smul.addr %s333, 4
        %s335 = scalar_lea.vmem %s5, %s334
        %s336 = smul.u32 4, %s24
      $region40: #{tpu_custom_call.1} parent=31 // pred_fallthru
        _
      // Predicated region
      $region41: #{tpu_custom_call.1} parent=31 // pred_check
        %p337 = pneg %p190
      $region42: #{tpu_custom_call.1} parent=31 // pred_check_branch
        %339 = sbr.rel (%p337) target = $region44
      $region43: #{tpu_custom_call.1} parent=31 // pred_region
        %s340 = smul.u32 4, %s24
        %p341 = scmp.lt.s32.totalorder %s23, 1
        %s342 = scalar_select %p341, %s23, 1
        %p343 = scmp.lt.s32.totalorder %s340, 3
        %s344 = scalar_select %p343, %s340, 3
        %s345 = smul.addr %s342, 4
        %s346 = sadd.s32 %s344, %s345
        %s347 = smul.addr %s346, 4
        %s348 = scalar_lea.vmem %s6, %s347
        %s349 = smul.u32 4, %s24
      $region44: #{tpu_custom_call.1} parent=31 // pred_fallthru
        _
      // Predicated region
      $region45: #{tpu_custom_call.1} parent=31 // pred_check
        %p350 = pneg %p218
      $region46: #{tpu_custom_call.1} parent=31 // pred_check_branch
        %352 = sbr.rel (%p350) target = $region48
      $region47: #{tpu_custom_call.1} parent=31 // pred_region
        %s353 = smul.u32 4, %s24
        %p354 = scmp.lt.s32.totalorder %s23, 1
        %s355 = scalar_select %p354, %s23, 1
        %p356 = scmp.lt.s32.totalorder %s353, 3
        %s357 = scalar_select %p356, %s353, 3
        %s358 = smul.addr %s355, 4
        %s359 = sadd.s32 %s357, %s358
        %s360 = smul.addr %s359, 2
        %s361 = scalar_lea.vmem %s7, %s360
        %s362 = smul.u32 4, %s24
      $region48: #{tpu_custom_call.1} parent=31 // pred_fallthru
        _
    $region32: #{tpu_custom_call.1} parent=5 // pred_fallthru
      _
    %p363 = scmp.le.s32.totalorder 1, %s16
    %p364 = scmp.lt.s32.totalorder %s16, 3
    %p365 = pnand %p363, %p364
    %p366 = pneg %p365
    // Predicated region
    $region49: #{tpu_custom_call.1} parent=5 // pred_check
      _
    $region50: #{tpu_custom_call.1} parent=5 // pred_check_branch
      %368 = sbr.rel (%p365) target = $region52
    $region51: #{tpu_custom_call.1} parent=5 // pred_region
      %s369 = ssub.s32 %s16, 1
      %p370 = pneg %p49
      %p371 = pneg %p46
      %p372 = pneg %p70
      %p373 = pneg %p67
      %p374 = pneg %p91
      %p375 = pneg %p88
      %p376 = pneg %p112
      %p377 = pneg %p109
      %s378 = smul.u32 4, %s26
      %p379 = scmp.lt.s32.totalorder %s25, 1
      %s380 = scalar_select %p379, %s25, 1
      %p381 = scmp.lt.s32.totalorder %s378, 3
      %s382 = scalar_select %p381, %s378, 3
      %s383 = smul.addr %s380, 4
      %s384 = sadd.s32 %s382, %s383
      %s385 = smul.addr %s384, 8
      %s386 = scalar_lea.vmem %s4, %s385
      %p387 = pneg %p140
      %p388 = pneg %p137
      %s389 = smul.u32 4, %s26
      %p390 = scmp.lt.s32.totalorder %s25, 1
      %s391 = scalar_select %p390, %s25, 1
      %p392 = scmp.lt.s32.totalorder %s389, 3
      %s393 = scalar_select %p392, %s389, 3
      %s394 = smul.addr %s391, 4
      %s395 = sadd.s32 %s393, %s394
      %s396 = smul.addr %s395, 4
      %s397 = scalar_lea.vmem %s5, %s396
      %p398 = pneg %p168
      %p399 = pneg %p165
      %s400 = smul.u32 4, %s26
      %p401 = scmp.lt.s32.totalorder %s25, 1
      %s402 = scalar_select %p401, %s25, 1
      %p403 = scmp.lt.s32.totalorder %s400, 3
      %s404 = scalar_select %p403, %s400, 3
      %s405 = smul.addr %s402, 4
      %s406 = sadd.s32 %s404, %s405
      %s407 = smul.addr %s406, 4
      %s408 = scalar_lea.vmem %s6, %s407
      %p409 = pneg %p196
      %p410 = pneg %p193
      %s411 = smul.u32 4, %s26
      %p412 = scmp.lt.s32.totalorder %s25, 1
      %s413 = scalar_select %p412, %s25, 1
      %p414 = scmp.lt.s32.totalorder %s411, 3
      %s415 = scalar_select %p414, %s411, 3
      %s416 = smul.addr %s413, 4
      %s417 = sadd.s32 %s415, %s416
      %s418 = smul.addr %s417, 2
      %s419 = scalar_lea.vmem %s7, %s418
      %p420 = pneg %p224
      %p421 = pneg %p221
      %p422 = pneg %p252
      %p423 = pneg %p249
      %s424 = smul.u32 4, %s26
      %p425 = scmp.lt.s32.totalorder %s25, 1
      %s426 = scalar_select %p425, %s25, 1
      %p427 = scmp.lt.s32.totalorder %s424, 3
      %s428 = scalar_select %p427, %s424, 3
      %s429 = smul.addr %s426, 4
      %s430 = sadd.s32 %s428, %s429
      %s431 = smul.addr %s430, 8
      %s432 = scalar_lea.vmem %s8, %s431
      %p433 = pneg %p280
      %p434 = pneg %p277
      %s435 = smul.u32 4, %s26
      %p436 = scmp.lt.s32.totalorder %s25, 1
      %s437 = scalar_select %p436, %s25, 1
      %p438 = scmp.lt.s32.totalorder %s435, 3
      %s439 = scalar_select %p438, %s435, 3
      %s440 = smul.addr %s437, 8
      %s441 = sadd.s32 %s439, %s440
      %s442 = smul.addr %s441, 8
      %s443 = scalar_lea.vmem %s9, %s442
      %s444 = smul.u32 4, %s26
      %p445 = scmp.lt.s32.totalorder %s25, 1
      %s446 = scalar_select %p445, %s25, 1
      %p447 = scmp.lt.s32.totalorder %s444, 3
      %s448 = scalar_select %p447, %s444, 3
      %s449 = smul.addr %s446, 4
      %s450 = sadd.s32 %s448, %s449
      %s451 = smul.addr %s450, 8
      %s452 = scalar_lea.vmem %s4, %s451
      %s453 = smul.u32 4, %s26
      %s454 = smul.u32 4, %s26
      %p455 = scmp.lt.s32.totalorder %s25, 1
      %s456 = scalar_select %p455, %s25, 1
      %p457 = scmp.lt.s32.totalorder %s454, 3
      %s458 = scalar_select %p457, %s454, 3
      %s459 = smul.addr %s456, 4
      %s460 = sadd.s32 %s458, %s459
      %s461 = smul.addr %s460, 4
      %s462 = scalar_lea.vmem %s5, %s461
      %s463 = smul.u32 4, %s26
      %s464 = smul.u32 4, %s26
      %p465 = scmp.lt.s32.totalorder %s25, 1
      %s466 = scalar_select %p465, %s25, 1
      %p467 = scmp.lt.s32.totalorder %s464, 3
      %s468 = scalar_select %p467, %s464, 3
      %s469 = smul.addr %s466, 4
      %s470 = sadd.s32 %s468, %s469
      %s471 = smul.addr %s470, 4
      %s472 = scalar_lea.vmem %s6, %s471
      %s473 = smul.u32 4, %s26
      %s474 = smul.u32 4, %s26
      %p475 = scmp.lt.s32.totalorder %s25, 1
      %s476 = scalar_select %p475, %s25, 1
      %p477 = scmp.lt.s32.totalorder %s474, 3
      %s478 = scalar_select %p477, %s474, 3
      %s479 = smul.addr %s476, 4
      %s480 = sadd.s32 %s478, %s479
      %s481 = smul.addr %s480, 2
      %s482 = scalar_lea.vmem %s7, %s481
      %s483 = smul.u32 4, %s26
      %s484 = smul.u32 4, %s26
      %p485 = scmp.lt.s32.totalorder %s25, 1
      %s486 = scalar_select %p485, %s25, 1
      %p487 = scmp.lt.s32.totalorder %s484, 3
      %s488 = scalar_select %p487, %s484, 3
      %s489 = smul.addr %s486, 4
      %s490 = sadd.s32 %s488, %s489
      %s491 = smul.addr %s490, 8
      %s492 = scalar_lea.vmem %s8, %s491
      %s493 = smul.u32 4, %s26
      %s494 = smul.u32 4, %s26
      %p495 = scmp.lt.s32.totalorder %s25, 1
      %s496 = scalar_select %p495, %s25, 1
      %p497 = scmp.lt.s32.totalorder %s494, 3
      %s498 = scalar_select %p497, %s494, 3
      %s499 = smul.addr %s496, 8
      %s500 = sadd.s32 %s498, %s499
      %s501 = smul.addr %s500, 8
      %s502 = scalar_lea.vmem %s9, %s501
      %s503 = smul.u32 4, %s26
      %v504 = vld [vmem:[%s452] sm:$0x3f]
      %v505 = vld [vmem:[%s452 + $0x8] sm:$0x3f]
      %v506 = vld [vmem:[%s452 + $0x10] sm:$0x3f]
      %v507 = vld [vmem:[%s452 + $0x18] sm:$0x3f]
      %508 = vst [vmem:[%s502] sm:$0x3f] %v504
      %509 = vst [vmem:[%s502 + $0x8] sm:$0x3f] %v505
      %510 = vst [vmem:[%s502 + $0x10] sm:$0x3f] %v506
      %511 = vst [vmem:[%s502 + $0x18] sm:$0x3f] %v507
      %v512 = vld [vmem:[%s462] sm:$0x77]
      %v513 = vld [vmem:[%s462 + $0x8] sm:$0x77]
      %v516 = vcombine.high %v512, %v512
      %v517 = vcombine.high %v513, %v513
      %v518 = vrot.slane %v512, 2
      %v519 = vrot.slane %v516, 2
      %v520 = vrot.slane %v513, 2
      %v521 = vrot.slane %v517, 2
      %526 = vst [vmem:[%s502] sm:$0xc0] %v518
      %527 = vst [vmem:[%s502 + $0x8] sm:$0xc0] %v519
      %528 = vst [vmem:[%s502 + $0x10] sm:$0xc0] %v520
      %529 = vst [vmem:[%s502 + $0x18] sm:$0xc0] %v521
      %530 = vst [vmem:[%s502 + $0x20] sm:$0x1] %v518
      %531 = vst [vmem:[%s502 + $0x28] sm:$0x1] %v519
      %532 = vst [vmem:[%s502 + $0x30] sm:$0x1] %v520
      %533 = vst [vmem:[%s502 + $0x38] sm:$0x1] %v521
      %v534 = vld [vmem:[%s0] sm:$0x7]
      %v535 = vld [vmem:[%s452] sm:$0x3f]
      %v536 = vld [vmem:[%s452 + $0x8] sm:$0x3f]
      %v537 = vld [vmem:[%s452 + $0x10] sm:$0x3f]
      %v538 = vld [vmem:[%s452 + $0x18] sm:$0x3f]
      %v539 = vld [vmem:[%s1] sm:$0x7]
      %541 = vset.pattern.permute.xlu0 0
      %542 = vperm.xlu0 %541, %v539
      %v543 = vpop.permute.xlu0 %542
      %vm545 = vcmask 48128
      %v547 = vsel %vm545, %v534, 0
      %vm549 = vcmask 1045504
      %v551 = vsel %vm549, %v535, 0
      %v554 = vsel %vm549, %v536, 0
      %v557 = vsel %vm549, %v537, 0
      %v560 = vsel %vm549, %v538, 0
      %562 = vmatprep.subr.mxu0 0.0
      %563 = vmatpush1.msra.mxu0 0.0
      %564 = vmatprep.subr.mxu0 0.0
      %565 = vmatpush1.msra.mxu0 0.0
      %566 = vmatprep.subr.mxu0 0.0
      %567 = vmatpush1.msra.mxu0 0.0
      %568 = vmatprep.subr.mxu0 0.0
      %569 = vmatpush1.msra.mxu0 0.0
      %570 = vmatprep.subr.mxu0 0.0
      %571 = vmatpush1.msra.mxu0 0.0
      %572 = vmatprep.subr.mxu0 0.0
      %573 = vmatpush1.msra.mxu0 0.0
      %574 = vmatprep.subr.mxu0 0.0
      %575 = vmatpush1.msra.mxu0 0.0
      %576 = vmatprep.subr.mxu0 0.0
      %577 = vmatpush1.msra.mxu0 0.0
      %578 = vmatprep.subr.mxu0 0.0
      %579 = vmatpush1.msra.mxu0 0.0
      %580 = vmatprep.subr.mxu0 0.0
      %581 = vmatpush1.msra.mxu0 0.0
      %582 = vmatprep.subr.mxu0 0.0
      %583 = vmatpush1.msra.mxu0 0.0
      %584 = vmatprep.subr.mxu0 0.0
      %585 = vmatpush1.msra.mxu0 0.0
      %586 = vmatprep.subr.mxu0 0.0
      %587 = vmatpush1.msra.mxu0 0.0
      %588 = vmatprep.subr.mxu0 0.0
      %589 = vmatpush1.msra.mxu0 0.0
      %590 = vmatprep.subr.mxu0 0.0
      %591 = vmatpush1.msra.mxu0 0.0
      %592 = vmatprep.subr.mxu0 %v554
      %593 = vmatpush1.msra.mxu0 %v551
      %594 = vmatprep.subr.mxu0 0.0
      %595 = vmatpush2.msra.mxu0 0.0
      %596 = vmatprep.subr.mxu0 0.0
      %597 = vmatpush2.msra.mxu0 0.0
      %598 = vmatprep.subr.mxu0 0.0
      %599 = vmatpush2.msra.mxu0 0.0
      %600 = vmatprep.subr.mxu0 0.0
      %601 = vmatpush2.msra.mxu0 0.0
      %602 = vmatprep.subr.mxu0 0.0
      %603 = vmatpush2.msra.mxu0 0.0
      %604 = vmatprep.subr.mxu0 0.0
      %605 = vmatpush2.msra.mxu0 0.0
      %606 = vmatprep.subr.mxu0 0.0
      %607 = vmatpush2.msra.mxu0 0.0
      %608 = vmatprep.subr.mxu0 0.0
      %609 = vmatpush2.msra.mxu0 0.0
      %610 = vmatprep.subr.mxu0 0.0
      %611 = vmatpush2.msra.mxu0 0.0
      %612 = vmatprep.subr.mxu0 0.0
      %613 = vmatpush2.msra.mxu0 0.0
      %614 = vmatprep.subr.mxu0 0.0
      %615 = vmatpush2.msra.mxu0 0.0
      %616 = vmatprep.subr.mxu0 0.0
      %617 = vmatpush2.msra.mxu0 0.0
      %618 = vmatprep.subr.mxu0 0.0
      %619 = vmatpush2.msra.mxu0 0.0
      %620 = vmatprep.subr.mxu0 0.0
      %621 = vmatpush2.msra.mxu0 0.0
      %622 = vmatprep.subr.mxu0 0.0
      %623 = vmatpush2.msra.mxu0 0.0
      %624 = vmatprep.subr.mxu0 0.0
      %625 = vmatpush2.msra.mxu0 0.0
      %626 = vmatprep.mubr.f32.mxu0 0.0
      %627 = vmatmul.mubr.f32.gmra.mxu0 %v547
      %v628 = vpop.f32.mrf.mxu0
      %v629 = vadd.f32 %v543, %v628
      %v630 = vpop.f32.mrf.mxu0
      %v631 = vadd.f32 %v543, %v630
      %632 = vdwg.mxu0
      %633 = vmatprep.subr.mxu0 0.0
      %634 = vmatpush1.msra.mxu0 0.0
      %635 = vmatprep.subr.mxu0 0.0
      %636 = vmatpush1.msra.mxu0 0.0
      %637 = vmatprep.subr.mxu0 0.0
      %638 = vmatpush1.msra.mxu0 0.0
      %639 = vmatprep.subr.mxu0 0.0
      %640 = vmatpush1.msra.mxu0 0.0
      %641 = vmatprep.subr.mxu0 0.0
      %642 = vmatpush1.msra.mxu0 0.0
      %643 = vmatprep.subr.mxu0 0.0
      %644 = vmatpush1.msra.mxu0 0.0
      %645 = vmatprep.subr.mxu0 0.0
      %646 = vmatpush1.msra.mxu0 0.0
      %647 = vmatprep.subr.mxu0 0.0
      %648 = vmatpush1.msra.mxu0 0.0
      %649 = vmatprep.subr.mxu0 0.0
      %650 = vmatpush1.msra.mxu0 0.0
      %651 = vmatprep.subr.mxu0 0.0
      %652 = vmatpush1.msra.mxu0 0.0
      %653 = vmatprep.subr.mxu0 0.0
      %654 = vmatpush1.msra.mxu0 0.0
      %655 = vmatprep.subr.mxu0 0.0
      %656 = vmatpush1.msra.mxu0 0.0
      %657 = vmatprep.subr.mxu0 0.0
      %658 = vmatpush1.msra.mxu0 0.0
      %659 = vmatprep.subr.mxu0 0.0
      %660 = vmatpush1.msra.mxu0 0.0
      %661 = vmatprep.subr.mxu0 0.0
      %662 = vmatpush1.msra.mxu0 0.0
      %663 = vmatprep.subr.mxu0 %v560
      %664 = vmatpush1.msra.mxu0 %v557
      %665 = vmatprep.subr.mxu0 0.0
      %666 = vmatpush2.msra.mxu0 0.0
      %667 = vmatprep.subr.mxu0 0.0
      %668 = vmatpush2.msra.mxu0 0.0
      %669 = vmatprep.subr.mxu0 0.0
      %670 = vmatpush2.msra.mxu0 0.0
      %671 = vmatprep.subr.mxu0 0.0
      %672 = vmatpush2.msra.mxu0 0.0
      %673 = vmatprep.subr.mxu0 0.0
      %674 = vmatpush2.msra.mxu0 0.0
      %675 = vmatprep.subr.mxu0 0.0
      %676 = vmatpush2.msra.mxu0 0.0
      %677 = vmatprep.subr.mxu0 0.0
      %678 = vmatpush2.msra.mxu0 0.0
      %679 = vmatprep.subr.mxu0 0.0
      %680 = vmatpush2.msra.mxu0 0.0
      %681 = vmatprep.subr.mxu0 0.0
      %682 = vmatpush2.msra.mxu0 0.0
      %683 = vmatprep.subr.mxu0 0.0
      %684 = vmatpush2.msra.mxu0 0.0
      %685 = vmatprep.subr.mxu0 0.0
      %686 = vmatpush2.msra.mxu0 0.0
      %687 = vmatprep.subr.mxu0 0.0
      %688 = vmatpush2.msra.mxu0 0.0
      %689 = vmatprep.subr.mxu0 0.0
      %690 = vmatpush2.msra.mxu0 0.0
      %691 = vmatprep.subr.mxu0 0.0
      %692 = vmatpush2.msra.mxu0 0.0
      %693 = vmatprep.subr.mxu0 0.0
      %694 = vmatpush2.msra.mxu0 0.0
      %695 = vmatprep.subr.mxu0 0.0
      %696 = vmatpush2.msra.mxu0 0.0
      %697 = vmatprep.mubr.f32.mxu0 0.0
      %698 = vmatmul.mubr.f32.gmra.mxu0 %v547
      %v699 = vpop.f32.mrf.mxu0
      %v700 = vadd.f32 %v543, %v699
      %v701 = vpop.f32.mrf.mxu0
      %v702 = vadd.f32 %v543, %v701
      %703 = vdwg.mxu0
      %v704 = vld [vmem:[%s472] sm:$0x77]
      %v705 = vld [vmem:[%s472 + $0x8] sm:$0x77]
      %v708 = vcombine.high %v704, %v704
      %v709 = vcombine.high %v705, %v705
      %v712 = vmul.f32 %v629, %v704
      %v713 = vmul.f32 %v631, %v708
      %v714 = vmul.f32 %v700, %v705
      %v715 = vmul.f32 %v702, %v709
      %716 = vst [vmem:[%s492] sm:$0x7] %v712
      %717 = vst [vmem:[%s492 + $0x8] sm:$0x7] %v713
      %718 = vst [vmem:[%s492 + $0x10] sm:$0x7] %v714
      %719 = vst [vmem:[%s492 + $0x18] sm:$0x7] %v715
      %v720 = vld [vmem:[%s2] sm:$0x3]
      %v721 = vld [vmem:[%s462] sm:$0x77]
      %v722 = vld [vmem:[%s462 + $0x8] sm:$0x77]
      %v723 = vld [vmem:[%s3] sm:$0x3]
      %725 = vset.pattern.permute.xlu0 0
      %726 = vperm.xlu0 %725, %v723
      %v727 = vpop.permute.xlu0 %726
      %v731 = vcombine.high %v721, %v721
      %v732 = vcombine.high %v722, %v722
      %vm733 = vcmask 23552
      %v735 = vsel %vm733, %v720, 0
      %vm737 = vcmask 1042432
      %v738 = vsel %vm737, %v721, 0
      %v740 = vsel %vm737, %v731, 0
      %v742 = vsel %vm737, %v722, 0
      %v744 = vsel %vm737, %v732, 0
      %746 = vmatprep.subr.mxu0 0.0
      %747 = vmatpush1.msra.mxu0 0.0
      %748 = vmatprep.subr.mxu0 0.0
      %749 = vmatpush1.msra.mxu0 0.0
      %750 = vmatprep.subr.mxu0 0.0
      %751 = vmatpush1.msra.mxu0 0.0
      %752 = vmatprep.subr.mxu0 0.0
      %753 = vmatpush1.msra.mxu0 0.0
      %754 = vmatprep.subr.mxu0 0.0
      %755 = vmatpush1.msra.mxu0 0.0
      %756 = vmatprep.subr.mxu0 0.0
      %757 = vmatpush1.msra.mxu0 0.0
      %758 = vmatprep.subr.mxu0 0.0
      %759 = vmatpush1.msra.mxu0 0.0
      %760 = vmatprep.subr.mxu0 0.0
      %761 = vmatpush1.msra.mxu0 0.0
      %762 = vmatprep.subr.mxu0 0.0
      %763 = vmatpush1.msra.mxu0 0.0
      %764 = vmatprep.subr.mxu0 0.0
      %765 = vmatpush1.msra.mxu0 0.0
      %766 = vmatprep.subr.mxu0 0.0
      %767 = vmatpush1.msra.mxu0 0.0
      %768 = vmatprep.subr.mxu0 0.0
      %769 = vmatpush1.msra.mxu0 0.0
      %770 = vmatprep.subr.mxu0 0.0
      %771 = vmatpush1.msra.mxu0 0.0
      %772 = vmatprep.subr.mxu0 0.0
      %773 = vmatpush1.msra.mxu0 0.0
      %774 = vmatprep.subr.mxu0 0.0
      %775 = vmatpush1.msra.mxu0 0.0
      %776 = vmatprep.subr.mxu0 %v740
      %777 = vmatpush1.msra.mxu0 %v738
      %778 = vmatprep.subr.mxu0 0.0
      %779 = vmatpush2.msra.mxu0 0.0
      %780 = vmatprep.subr.mxu0 0.0
      %781 = vmatpush2.msra.mxu0 0.0
      %782 = vmatprep.subr.mxu0 0.0
      %783 = vmatpush2.msra.mxu0 0.0
      %784 = vmatprep.subr.mxu0 0.0
      %785 = vmatpush2.msra.mxu0 0.0
      %786 = vmatprep.subr.mxu0 0.0
      %787 = vmatpush2.msra.mxu0 0.0
      %788 = vmatprep.subr.mxu0 0.0
      %789 = vmatpush2.msra.mxu0 0.0
      %790 = vmatprep.subr.mxu0 0.0
      %791 = vmatpush2.msra.mxu0 0.0
      %792 = vmatprep.subr.mxu0 0.0
      %793 = vmatpush2.msra.mxu0 0.0
      %794 = vmatprep.subr.mxu0 0.0
      %795 = vmatpush2.msra.mxu0 0.0
      %796 = vmatprep.subr.mxu0 0.0
      %797 = vmatpush2.msra.mxu0 0.0
      %798 = vmatprep.subr.mxu0 0.0
      %799 = vmatpush2.msra.mxu0 0.0
      %800 = vmatprep.subr.mxu0 0.0
      %801 = vmatpush2.msra.mxu0 0.0
      %802 = vmatprep.subr.mxu0 0.0
      %803 = vmatpush2.msra.mxu0 0.0
      %804 = vmatprep.subr.mxu0 0.0
      %805 = vmatpush2.msra.mxu0 0.0
      %806 = vmatprep.subr.mxu0 0.0
      %807 = vmatpush2.msra.mxu0 0.0
      %808 = vmatprep.subr.mxu0 0.0
      %809 = vmatpush2.msra.mxu0 0.0
      %810 = vmatprep.mubr.f32.mxu0 0.0
      %811 = vmatmul.mubr.f32.gmra.mxu0 %v735
      %v812 = vpop.f32.mrf.mxu0
      %v813 = vadd.f32 %v727, %v812
      %v814 = vpop.f32.mrf.mxu0
      %v815 = vadd.f32 %v727, %v814
      %816 = vdwg.mxu0
      %817 = vmatprep.subr.mxu0 0.0
      %818 = vmatpush1.msra.mxu0 0.0
      %819 = vmatprep.subr.mxu0 0.0
      %820 = vmatpush1.msra.mxu0 0.0
      %821 = vmatprep.subr.mxu0 0.0
      %822 = vmatpush1.msra.mxu0 0.0
      %823 = vmatprep.subr.mxu0 0.0
      %824 = vmatpush1.msra.mxu0 0.0
      %825 = vmatprep.subr.mxu0 0.0
      %826 = vmatpush1.msra.mxu0 0.0
      %827 = vmatprep.subr.mxu0 0.0
      %828 = vmatpush1.msra.mxu0 0.0
      %829 = vmatprep.subr.mxu0 0.0
      %830 = vmatpush1.msra.mxu0 0.0
      %831 = vmatprep.subr.mxu0 0.0
      %832 = vmatpush1.msra.mxu0 0.0
      %833 = vmatprep.subr.mxu0 0.0
      %834 = vmatpush1.msra.mxu0 0.0
      %835 = vmatprep.subr.mxu0 0.0
      %836 = vmatpush1.msra.mxu0 0.0
      %837 = vmatprep.subr.mxu0 0.0
      %838 = vmatpush1.msra.mxu0 0.0
      %839 = vmatprep.subr.mxu0 0.0
      %840 = vmatpush1.msra.mxu0 0.0
      %841 = vmatprep.subr.mxu0 0.0
      %842 = vmatpush1.msra.mxu0 0.0
      %843 = vmatprep.subr.mxu0 0.0
      %844 = vmatpush1.msra.mxu0 0.0
      %845 = vmatprep.subr.mxu0 0.0
      %846 = vmatpush1.msra.mxu0 0.0
      %847 = vmatprep.subr.mxu0 %v744
      %848 = vmatpush1.msra.mxu0 %v742
      %849 = vmatprep.subr.mxu0 0.0
      %850 = vmatpush2.msra.mxu0 0.0
      %851 = vmatprep.subr.mxu0 0.0
      %852 = vmatpush2.msra.mxu0 0.0
      %853 = vmatprep.subr.mxu0 0.0
      %854 = vmatpush2.msra.mxu0 0.0
      %855 = vmatprep.subr.mxu0 0.0
      %856 = vmatpush2.msra.mxu0 0.0
      %857 = vmatprep.subr.mxu0 0.0
      %858 = vmatpush2.msra.mxu0 0.0
      %859 = vmatprep.subr.mxu0 0.0
      %860 = vmatpush2.msra.mxu0 0.0
      %861 = vmatprep.subr.mxu0 0.0
      %862 = vmatpush2.msra.mxu0 0.0
      %863 = vmatprep.subr.mxu0 0.0
      %864 = vmatpush2.msra.mxu0 0.0
      %865 = vmatprep.subr.mxu0 0.0
      %866 = vmatpush2.msra.mxu0 0.0
      %867 = vmatprep.subr.mxu0 0.0
      %868 = vmatpush2.msra.mxu0 0.0
      %869 = vmatprep.subr.mxu0 0.0
      %870 = vmatpush2.msra.mxu0 0.0
      %871 = vmatprep.subr.mxu0 0.0
      %872 = vmatpush2.msra.mxu0 0.0
      %873 = vmatprep.subr.mxu0 0.0
      %874 = vmatpush2.msra.mxu0 0.0
      %875 = vmatprep.subr.mxu0 0.0
      %876 = vmatpush2.msra.mxu0 0.0
      %877 = vmatprep.subr.mxu0 0.0
      %878 = vmatpush2.msra.mxu0 0.0
      %879 = vmatprep.subr.mxu0 0.0
      %880 = vmatpush2.msra.mxu0 0.0
      %881 = vmatprep.mubr.f32.mxu0 0.0
      %882 = vmatmul.mubr.f32.gmra.mxu0 %v735
      %v883 = vpop.f32.mrf.mxu0
      %v884 = vadd.f32 %v727, %v883
      %v885 = vpop.f32.mrf.mxu0
      %v886 = vadd.f32 %v727, %v885
      %887 = vdwg.mxu0
      %v888 = vld [vmem:[%s482] sm:$0xff]
      %v890 = vcombine.high %v888, %v888
      %v892 = vunpack.c.l.s4 1983009808
      %v893 = vunpack.c.0.s8 %v892
      %v894 = vlaneseq
      %v895 = vshrl.u32 %v894, 7
      %v896 = vsub.s32 %v893, %v895
      %v897 = vrot.slane %v888, %v896
      %v899 = vunpack.c.l.s4 1983009808
      %v900 = vunpack.c.0.s8 %v899
      %v901 = vlaneseq
      %v902 = vshrl.u32 %v901, 7
      %v903 = vsub.s32 %v900, %v902
      %v904 = vrot.slane %v890, %v903
      %v905 = vcombine.high %v897, %v897
      %v906 = vcombine.high %v904, %v904
      %v911 = vmul.f32 %v813, %v897
      %v912 = vmul.f32 %v815, %v905
      %v913 = vmul.f32 %v884, %v904
      %v914 = vmul.f32 %v886, %v906
      %v919 = vrot.slane %v911, 5
      %v920 = vrot.slane %v912, 5
      %v921 = vrot.slane %v913, 5
      %v922 = vrot.slane %v914, 5
      %927 = vst [vmem:[%s492] sm:$0x18] %v919
      %928 = vst [vmem:[%s492 + $0x8] sm:$0x18] %v920
      %929 = vst [vmem:[%s492 + $0x10] sm:$0x18] %v921
      %930 = vst [vmem:[%s492 + $0x18] sm:$0x18] %v922
      %s931 = smul.u32 4, %s26
      %p932 = scmp.lt.s32.totalorder %s25, 1
      %s933 = scalar_select %p932, %s25, 1
      %p934 = scmp.lt.s32.totalorder %s931, 3
      %s935 = scalar_select %p934, %s931, 3
      %s936 = smul.addr %s933, 4
      %s937 = sadd.s32 %s935, %s936
      %s938 = smul.addr %s937, 8
      %s939 = scalar_lea.vmem %s8, %s938
      %s940 = smul.u32 4, %s26
      %p941 = scmp.lt.s32.totalorder %s25, 1
      %s942 = scalar_select %p941, %s25, 1
      %p943 = scmp.lt.s32.totalorder %s940, 3
      %s944 = scalar_select %p943, %s940, 3
      %s945 = smul.addr %s942, 8
      %s946 = sadd.s32 %s944, %s945
      %s947 = smul.addr %s946, 8
      %s948 = scalar_lea.vmem %s9, %s947
      // Predicated region
      $region53: #{tpu_custom_call.1} parent=51 // pred_check
        %p949 = pneg %p249
      $region54: #{tpu_custom_call.1} parent=51 // pred_check_branch
        %951 = sbr.rel (%p949) target = $region56
      $region55: #{tpu_custom_call.1} parent=51 // pred_region
        %s952 = smul.u32 4, %s26
      $region56: #{tpu_custom_call.1} parent=51 // pred_fallthru
        _
      // Predicated region
      $region57: #{tpu_custom_call.1} parent=51 // pred_check
        %p953 = pneg %p277
      $region58: #{tpu_custom_call.1} parent=51 // pred_check_branch
        %955 = sbr.rel (%p953) target = $region60
      $region59: #{tpu_custom_call.1} parent=51 // pred_region
        %s956 = smul.u32 4, %s26
      $region60: #{tpu_custom_call.1} parent=51 // pred_fallthru
        _
    $region52: #{tpu_custom_call.1} parent=5 // pred_fallthru
      _
    %p957 = scmp.le.s32.totalorder 2, %s16
    // Predicated region
    $region61: #{tpu_custom_call.1} parent=5 // pred_check
      %p958 = pneg %p957
    $region62: #{tpu_custom_call.1} parent=5 // pred_check_branch
      %960 = sbr.rel (%p958) target = $region64
    $region63: #{tpu_custom_call.1} parent=5 // pred_region
      %s961 = ssub.s32 %s16, 2
      // Predicated region
      $region65: #{tpu_custom_call.1} parent=63 // pred_check
        %p962 = pneg %p255
      $region66: #{tpu_custom_call.1} parent=63 // pred_check_branch
        %964 = sbr.rel (%p962) target = $region68
      $region67: #{tpu_custom_call.1} parent=63 // pred_region
        %s965 = smul.u32 4, %s28
        %p966 = scmp.lt.s32.totalorder %s27, 1
        %s967 = scalar_select %p966, %s27, 1
        %p968 = scmp.lt.s32.totalorder %s965, 3
        %s969 = scalar_select %p968, %s965, 3
        %s970 = smul.addr %s967, 4
        %s971 = sadd.s32 %s969, %s970
        %s972 = smul.addr %s971, 8
        %s973 = scalar_lea.vmem %s8, %s972
      $region68: #{tpu_custom_call.1} parent=63 // pred_fallthru
        _
      // Predicated region
      $region69: #{tpu_custom_call.1} parent=63 // pred_check
        %p974 = pneg %p283
      $region70: #{tpu_custom_call.1} parent=63 // pred_check_branch
        %976 = sbr.rel (%p974) target = $region72
      $region71: #{tpu_custom_call.1} parent=63 // pred_region
        %s977 = smul.u32 4, %s28
        %p978 = scmp.lt.s32.totalorder %s27, 1
        %s979 = scalar_select %p978, %s27, 1
        %p980 = scmp.lt.s32.totalorder %s977, 3
        %s981 = scalar_select %p980, %s977, 3
        %s982 = smul.addr %s979, 8
        %s983 = sadd.s32 %s981, %s982
        %s984 = smul.addr %s983, 8
        %s985 = scalar_lea.vmem %s9, %s984
      $region72: #{tpu_custom_call.1} parent=63 // pred_fallthru
        _
    $region64: #{tpu_custom_call.1} parent=5 // pred_fallthru
      _
  $region6: #{tpu_custom_call.1} parent=0 // loop_footer
    %s20 = sadd.s32 1, %s16
  $region7: #{tpu_custom_call.1} parent=0 // loop_footer_branch
    %15 = sbr.rel target = $region3
  $region8: #{tpu_custom_call.1} parent=0 // loop_exit
    _

</llo_original>
